<compile_context>
chip_gen: v7x
topology: tpu7x:2x2x1
jax: 0.10.0
libtpu: 0.0.40
codegen_flags: <defaults>
</compile_context>

<pallas_src>
import functools
import math

import jax
import jax.numpy as jnp
from jax.experimental import pallas as pl
from jax.experimental.pallas import tpu as pltpu

INPUT_DIM = 2
HIDDEN_DIM = 50
OUTPUT_DIM = 1
NUM_HIDDEN_LAYERS = 3  # hidden->hidden layers (PyTorch module default)

HID_PAD_F32 = 56   # multiple of 8 sublanes (f32) -> least padded tanh work
HID_PAD_BF16 = 64  # multiple of 16 sublanes (bf16 packed layout)


def _pinn_kernel(x_ref,
                 w0_ref, b0_ref,
                 w1_ref, b1_ref,
                 w2_ref, b2_ref,
                 w3_ref, b3_ref,
                 w4_ref, b4_ref,
                 o_ref):
    """Feature-major MLP forward for one batch tile, all in VMEM.

    x_ref : (INPUT_DIM, tile_n)   -- batch on the lane axis, act_dtype
    wK_ref: (out_k, in_k)         -- PyTorch (out, in) orientation, act_dtype
    bK_ref: (out_k, 1)            -- f32, broadcast along lanes
    o_ref : (OUTPUT_DIM, tile_n)  -- lane-dense f32 output store
    """
    act_dtype = x_ref.dtype

    def layer(w_ref, b_ref, h):
        # MXU matmul with f32 accumulation; bias add in f32; tanh in act_dtype
        # (bf16 tanh hits the EUP bf16 path on v6e/v7x).
        pre = jnp.dot(w_ref[...], h, preferred_element_type=jnp.float32) + b_ref[...]
        return jnp.tanh(pre.astype(act_dtype))

    h = layer(w0_ref, b0_ref, x_ref[...])
    h = layer(w1_ref, b1_ref, h)
    h = layer(w2_ref, b2_ref, h)
    h = layer(w3_ref, b3_ref, h)
    out = jnp.dot(w4_ref[...], h, preferred_element_type=jnp.float32) + b4_ref[...]
    o_ref[...] = out.astype(o_ref.dtype)


def _round_up(v, m):
    return ((v + m - 1) // m) * m


def prepare_params(params, act_dtype=jnp.float32):
    """Pad / cast PyTorch-layout (W, b) pairs once, outside the hot path.

    Zero-padded weight rows + zero biases keep padded hidden rows at
    tanh(0) = 0 through every layer, so padding is numerically inert.
    """
    hid_pad = HID_PAD_BF16 if act_dtype == jnp.bfloat16 else HID_PAD_F32
    in_dims = [INPUT_DIM] + [HIDDEN_DIM] * (NUM_HIDDEN_LAYERS + 1)
    out_dims = [HIDDEN_DIM] * (NUM_HIDDEN_LAYERS + 1) + [OUTPUT_DIM]
    in_pads = [INPUT_DIM] + [hid_pad] * (NUM_HIDDEN_LAYERS + 1)
    out_pads = [hid_pad] * (NUM_HIDDEN_LAYERS + 1) + [OUTPUT_DIM]

    flat = []
    for (w, b), di, do, dip, dop in zip(params, in_dims, out_dims, in_pads, out_pads):
        wp = jnp.zeros((dop, dip), act_dtype).at[:do, :di].set(w.astype(act_dtype))
        bp = jnp.zeros((dop, 1), jnp.float32).at[:do, 0].set(b.astype(jnp.float32))
        flat += [wp, bp]
    return flat


@functools.partial(jax.jit, static_argnames=("tile_n",))
def pinn_forward(x, flat_params, *, tile_n=8192):
    """PINN forward.

    x           : (N, INPUT_DIM) float32 (PyTorch layout).
    flat_params : output of prepare_params() (padded/cast W0,b0,...,W4,b4).
    Returns     : (N, OUTPUT_DIM) float32.
    """
    n, d_in = x.shape
    assert d_in == INPUT_DIM
    act_dtype = flat_params[0].dtype

    # Lane tile: multiple of 128, clamped for small batches.  When there is
    # enough work, force >=2 grid steps so v7x megacore uses both TensorCores.
    n_ceil = _round_up(max(n, 1), 128)
    t = min(tile_n, n_ceil)
    if n_ceil >= 256:
        t = min(t, _round_up(pl.cdiv(n_ceil, 2), 128))
    t = max(128, _round_up(t, 128))
    n_pad = _round_up(n, t)
    grid = (n_pad // t,)

    # Minimal feature-major input slab (2, n_pad): batch on lanes, no feature
    # padding.  Fuses into one small XLA op under jit; padded batch columns are
    # zero and are sliced off below.
    xt = jnp.zeros((d_in, n_pad), act_dtype).at[:, :n].set(x.T.astype(act_dtype))

    # Full-array blocks with constant index maps -> weights resident in VMEM.
    weight_specs = [pl.BlockSpec(p.shape, lambda i: (0, 0)) for p in flat_params]
    in_specs = [pl.BlockSpec((d_in, t), lambda i: (0, i))] + weight_specs
    out_spec = pl.BlockSpec((OUTPUT_DIM, t), lambda i: (0, i))

    out_t = pl.pallas_call(
        _pinn_kernel,
        out_shape=jax.ShapeDtypeStruct((OUTPUT_DIM, n_pad), jnp.float32),
        grid_spec=pltpu.PrefetchScalarGridSpec(
            num_scalar_prefetch=0,
            grid=grid,
            in_specs=in_specs,
            out_specs=out_spec,
        ),
        compiler_params=pltpu.CompilerParams(
            dimension_semantics=("parallel",),       # shard steps across TCs (v7x)
            vmem_limit_bytes=32 * 1024 * 1024,       # headroom for 8192-lane tiles
        ),
    )(xt, *flat_params)

    # Back to PyTorch layout (N, OUTPUT_DIM), dropping batch padding.
    return out_t[:, :n].T


def init_params(key):
    """PyTorch-style nn.Linear init: W (out, in), b (out,), U(-1/sqrt(fan_in), +)."""
    dims = [INPUT_DIM] + [HIDDEN_DIM] * (NUM_HIDDEN_LAYERS + 1) + [OUTPUT_DIM]
    params = []
    for i in range(len(dims) - 1):
        fan_in, fan_out = dims[i], dims[i + 1]
        key, kw, kb = jax.random.split(key, 3)
        bound = 1.0 / math.sqrt(fan_in)
        w = jax.random.uniform(kw, (fan_out, fan_in), jnp.float32, -bound, bound)
        b = jax.random.uniform(kb, (fan_out,), jnp.float32, -bound, bound)
        params.append((w, b))
    return params


def pinn_reference(x, params):
    """Plain-JAX reference (PyTorch semantics: x @ W.T + b)."""
    h = x
    for i, (w, b) in enumerate(params):
        h = h @ w.T + b
        if i < len(params) - 1:
            h = jnp.tanh(h)
    return h


if __name__ == "__main__":
    key = jax.random.PRNGKey(0)
    key, kx = jax.random.split(key)

    batch = 200  # deliberately NOT a multiple of 128; wrapper pads (grid of 2 steps)
    x = jax.random.normal(kx, (batch, INPUT_DIM), dtype=jnp.float32)
    params = init_params(key)
    ref = pinn_reference(x, params)

    # f32 path (exact vs reference; the safe path on every generation incl. v5e).
    p_f32 = prepare_params(params, jnp.float32)
    out_f32 = jax.block_until_ready(pinn_forward(x, p_f32, tile_n=8192))
    assert out_f32.shape == (batch, OUTPUT_DIM), out_f32.shape
    assert jnp.allclose(out_f32, ref, atol=1e-4, rtol=1e-4), (
        float(jnp.max(jnp.abs(out_f32 - ref)))
    )

    # bf16 activation/tanh path (EUP/VPU bf16 win on v6e/v7x; looser tolerance).
    p_bf16 = prepare_params(params, jnp.bfloat16)
    out_bf16 = jax.block_until_ready(pinn_forward(x, p_bf16, tile_n=8192))
    assert out_bf16.shape == (batch, OUTPUT_DIM), out_bf16.shape
    assert jnp.allclose(out_bf16, ref, atol=5e-2, rtol=5e-2), (
        float(jnp.max(jnp.abs(out_bf16 - ref)))
    )

    print("KERNEL_OK")
</pallas_src>

<mosaic_0001>
module attributes {stable_mosaic.version = 11 : i64} {
  func.func @_pinn_kernel(%arg0: i32, %arg1: memref<2x128xf32, #tpu.memory_space<vmem>>, %arg2: memref<56x2xf32, #tpu.memory_space<vmem>>, %arg3: memref<56x1xf32, #tpu.memory_space<vmem>>, %arg4: memref<56x56xf32, #tpu.memory_space<vmem>>, %arg5: memref<56x1xf32, #tpu.memory_space<vmem>>, %arg6: memref<56x56xf32, #tpu.memory_space<vmem>>, %arg7: memref<56x1xf32, #tpu.memory_space<vmem>>, %arg8: memref<56x56xf32, #tpu.memory_space<vmem>>, %arg9: memref<56x1xf32, #tpu.memory_space<vmem>>, %arg10: memref<1x56xf32, #tpu.memory_space<vmem>>, %arg11: memref<1x1xf32, #tpu.memory_space<vmem>>, %arg12: memref<1x128xf32, #tpu.memory_space<vmem>>) attributes {dimension_semantics = [#tpu.dimension_semantics<parallel>], iteration_bounds = array<i64: 2>, scalar_prefetch = 0 : i64, scratch_operands = 0 : i64, tpu.core_type = #tpu.core_type<tc>, window_params = [{transform_indices = @transform_0, window_bounds = array<i64: 2, 128>}, {pipeline_mode = #tpu.pipeline_mode<synchronous>, transform_indices = @transform_1, window_bounds = array<i64: 56, 2>}, {pipeline_mode = #tpu.pipeline_mode<synchronous>, transform_indices = @transform_2, window_bounds = array<i64: 56, 1>}, {pipeline_mode = #tpu.pipeline_mode<synchronous>, transform_indices = @transform_3, window_bounds = array<i64: 56, 56>}, {pipeline_mode = #tpu.pipeline_mode<synchronous>, transform_indices = @transform_4, window_bounds = array<i64: 56, 1>}, {pipeline_mode = #tpu.pipeline_mode<synchronous>, transform_indices = @transform_5, window_bounds = array<i64: 56, 56>}, {pipeline_mode = #tpu.pipeline_mode<synchronous>, transform_indices = @transform_6, window_bounds = array<i64: 56, 1>}, {pipeline_mode = #tpu.pipeline_mode<synchronous>, transform_indices = @transform_7, window_bounds = array<i64: 56, 56>}, {pipeline_mode = #tpu.pipeline_mode<synchronous>, transform_indices = @transform_8, window_bounds = array<i64: 56, 1>}, {pipeline_mode = #tpu.pipeline_mode<synchronous>, transform_indices = @transform_9, window_bounds = array<i64: 1, 56>}, {pipeline_mode = #tpu.pipeline_mode<synchronous>, transform_indices = @transform_10, window_bounds = array<i64: 1, 1>}, {transform_indices = @transform_11, window_bounds = array<i64: 1, 128>}]} {
    %c0 = arith.constant 0 : index
    %c0_0 = arith.constant 0 : index
    %0 = vector.load %arg1[%c0, %c0_0] : memref<2x128xf32, #tpu.memory_space<vmem>>, vector<2x128xf32>
    %c0_1 = arith.constant 0 : index
    %c0_2 = arith.constant 0 : index
    %1 = vector.load %arg2[%c0_1, %c0_2] : memref<56x2xf32, #tpu.memory_space<vmem>>, vector<56x2xf32>
    %cst = arith.constant dense<0.000000e+00> : vector<56x128xf32>
    %2 = tpu.matmul %1, %0, %cst {dimension_numbers = #tpu.dot_dimension_numbers<[1], [0], [0], [1], [0, 0, 1, 1], [], []>} : vector<56x2xf32>, vector<2x128xf32>, vector<56x128xf32> -> vector<56x128xf32>
    %c0_3 = arith.constant 0 : index
    %c0_4 = arith.constant 0 : index
    %3 = vector.load %arg3[%c0_3, %c0_4] : memref<56x1xf32, #tpu.memory_space<vmem>>, vector<56x1xf32>
    %4 = vector.broadcast %3 : vector<56x1xf32> to vector<56x128xf32>
    %5 = arith.addf %2, %4 : vector<56x128xf32>
    %6 = math.tanh %5 : vector<56x128xf32>
    %c0_5 = arith.constant 0 : index
    %c0_6 = arith.constant 0 : index
    %7 = vector.load %arg4[%c0_5, %c0_6] : memref<56x56xf32, #tpu.memory_space<vmem>>, vector<56x56xf32>
    %cst_7 = arith.constant dense<0.000000e+00> : vector<56x128xf32>
    %8 = tpu.matmul %7, %6, %cst_7 {dimension_numbers = #tpu.dot_dimension_numbers<[1], [0], [0], [1], [0, 0, 1, 1], [], []>} : vector<56x56xf32>, vector<56x128xf32>, vector<56x128xf32> -> vector<56x128xf32>
    %c0_8 = arith.constant 0 : index
    %c0_9 = arith.constant 0 : index
    %9 = vector.load %arg5[%c0_8, %c0_9] : memref<56x1xf32, #tpu.memory_space<vmem>>, vector<56x1xf32>
    %10 = vector.broadcast %9 : vector<56x1xf32> to vector<56x128xf32>
    %11 = arith.addf %8, %10 : vector<56x128xf32>
    %12 = math.tanh %11 : vector<56x128xf32>
    %c0_10 = arith.constant 0 : index
    %c0_11 = arith.constant 0 : index
    %13 = vector.load %arg6[%c0_10, %c0_11] : memref<56x56xf32, #tpu.memory_space<vmem>>, vector<56x56xf32>
    %cst_12 = arith.constant dense<0.000000e+00> : vector<56x128xf32>
    %14 = tpu.matmul %13, %12, %cst_12 {dimension_numbers = #tpu.dot_dimension_numbers<[1], [0], [0], [1], [0, 0, 1, 1], [], []>} : vector<56x56xf32>, vector<56x128xf32>, vector<56x128xf32> -> vector<56x128xf32>
    %c0_13 = arith.constant 0 : index
    %c0_14 = arith.constant 0 : index
    %15 = vector.load %arg7[%c0_13, %c0_14] : memref<56x1xf32, #tpu.memory_space<vmem>>, vector<56x1xf32>
    %16 = vector.broadcast %15 : vector<56x1xf32> to vector<56x128xf32>
    %17 = arith.addf %14, %16 : vector<56x128xf32>
    %18 = math.tanh %17 : vector<56x128xf32>
    %c0_15 = arith.constant 0 : index
    %c0_16 = arith.constant 0 : index
    %19 = vector.load %arg8[%c0_15, %c0_16] : memref<56x56xf32, #tpu.memory_space<vmem>>, vector<56x56xf32>
    %cst_17 = arith.constant dense<0.000000e+00> : vector<56x128xf32>
    %20 = tpu.matmul %19, %18, %cst_17 {dimension_numbers = #tpu.dot_dimension_numbers<[1], [0], [0], [1], [0, 0, 1, 1], [], []>} : vector<56x56xf32>, vector<56x128xf32>, vector<56x128xf32> -> vector<56x128xf32>
    %c0_18 = arith.constant 0 : index
    %c0_19 = arith.constant 0 : index
    %21 = vector.load %arg9[%c0_18, %c0_19] : memref<56x1xf32, #tpu.memory_space<vmem>>, vector<56x1xf32>
    %22 = vector.broadcast %21 : vector<56x1xf32> to vector<56x128xf32>
    %23 = arith.addf %20, %22 : vector<56x128xf32>
    %24 = math.tanh %23 : vector<56x128xf32>
    %c0_20 = arith.constant 0 : index
    %c0_21 = arith.constant 0 : index
    %25 = vector.load %arg10[%c0_20, %c0_21] : memref<1x56xf32, #tpu.memory_space<vmem>>, vector<1x56xf32>
    %cst_22 = arith.constant dense<0.000000e+00> : vector<1x128xf32>
    %26 = tpu.matmul %25, %24, %cst_22 {dimension_numbers = #tpu.dot_dimension_numbers<[1], [0], [0], [1], [0, 0, 1, 1], [], []>} : vector<1x56xf32>, vector<56x128xf32>, vector<1x128xf32> -> vector<1x128xf32>
    %c0_23 = arith.constant 0 : index
    %c0_24 = arith.constant 0 : index
    %27 = vector.load %arg11[%c0_23, %c0_24] : memref<1x1xf32, #tpu.memory_space<vmem>>, vector<1x1xf32>
    %28 = vector.broadcast %27 : vector<1x1xf32> to vector<1x128xf32>
    %29 = arith.addf %26, %28 : vector<1x128xf32>
    %c0_25 = arith.constant 0 : index
    %c0_26 = arith.constant 0 : index
    %30 = vector.load %arg12[%c0_25, %c0_26] : memref<1x128xf32, #tpu.memory_space<vmem>>, vector<1x128xf32>
    tpu.vector_store %arg12[%c0_25, %c0_26], %29 {strides = array<i32>} : memref<1x128xf32, #tpu.memory_space<vmem>>, vector<1x128xf32>,
    return
  }
  func.func @transform_0(%arg0: i32) -> (i32, i32) {
    %c0_i32 = arith.constant 0 : i32
    %c0_i32_0 = arith.constant 0 : i32
    return %c0_i32, %arg0 : i32, i32
  }
  func.func @transform_1(%arg0: i32) -> (i32, i32) {
    %c0_i32 = arith.constant 0 : i32
    %c0_i32_0 = arith.constant 0 : i32
    %c0_i32_1 = arith.constant 0 : i32
    return %c0_i32, %c0_i32_0 : i32, i32
  }
  func.func @transform_2(%arg0: i32) -> (i32, i32) {
    %c0_i32 = arith.constant 0 : i32
    %c0_i32_0 = arith.constant 0 : i32
    %c0_i32_1 = arith.constant 0 : i32
    return %c0_i32, %c0_i32_0 : i32, i32
  }
  func.func @transform_3(%arg0: i32) -> (i32, i32) {
    %c0_i32 = arith.constant 0 : i32
    %c0_i32_0 = arith.constant 0 : i32
    %c0_i32_1 = arith.constant 0 : i32
    return %c0_i32, %c0_i32_0 : i32, i32
  }
  func.func @transform_4(%arg0: i32) -> (i32, i32) {
    %c0_i32 = arith.constant 0 : i32
    %c0_i32_0 = arith.constant 0 : i32
    %c0_i32_1 = arith.constant 0 : i32
    return %c0_i32, %c0_i32_0 : i32, i32
  }
  func.func @transform_5(%arg0: i32) -> (i32, i32) {
    %c0_i32 = arith.constant 0 : i32
    %c0_i32_0 = arith.constant 0 : i32
    %c0_i32_1 = arith.constant 0 : i32
    return %c0_i32, %c0_i32_0 : i32, i32
  }
  func.func @transform_6(%arg0: i32) -> (i32, i32) {
    %c0_i32 = arith.constant 0 : i32
    %c0_i32_0 = arith.constant 0 : i32
    %c0_i32_1 = arith.constant 0 : i32
    return %c0_i32, %c0_i32_0 : i32, i32
  }
  func.func @transform_7(%arg0: i32) -> (i32, i32) {
    %c0_i32 = arith.constant 0 : i32
    %c0_i32_0 = arith.constant 0 : i32
    %c0_i32_1 = arith.constant 0 : i32
    return %c0_i32, %c0_i32_0 : i32, i32
  }
  func.func @transform_8(%arg0: i32) -> (i32, i32) {
    %c0_i32 = arith.constant 0 : i32
    %c0_i32_0 = arith.constant 0 : i32
    %c0_i32_1 = arith.constant 0 : i32
    return %c0_i32, %c0_i32_0 : i32, i32
  }
  func.func @transform_9(%arg0: i32) -> (i32, i32) {
    %c0_i32 = arith.constant 0 : i32
    %c0_i32_0 = arith.constant 0 : i32
    %c0_i32_1 = arith.constant 0 : i32
    return %c0_i32, %c0_i32_0 : i32, i32
  }
  func.func @transform_10(%arg0: i32) -> (i32, i32) {
    %c0_i32 = arith.constant 0 : i32
    %c0_i32_0 = arith.constant 0 : i32
    %c0_i32_1 = arith.constant 0 : i32
    return %c0_i32, %c0_i32_0 : i32, i32
  }
  func.func @transform_11(%arg0: i32) -> (i32, i32) {
    %c0_i32 = arith.constant 0 : i32
    %c0_i32_0 = arith.constant 0 : i32
    return %c0_i32, %arg0 : i32, i32
  }
}

</mosaic_0001>

<llo_original>
// kernel: pinn_forward.1
$region0: #{pinn_forward.1}
  #allocation0 [shape = 'u32[]', space=smem, size = 0x4, offset = 0x4, fixed_abs, tag = 'smem constant byte address 0x4 - core index']
  #allocation1 [shape = 'u32[144,128]{1,0:T(1,128)}', space=vmem, size = 0x12000, scoped, tag = 'internal scratch']
  #allocation2 [shape = 'f32[1,1]{1,0:T(1,128)S(1)}', space=vmem, size = 0x200, scoped, tag = 'scoped memory for pinn_forward.1']
  %s0 = inlined_call_operand.vmem [shape: f32[2,256], index: 0, kind: input, shape index: {}]
  %s1 = inlined_call_operand.vmem [shape: f32[56,2], index: 1, kind: input, shape index: {}]
  %s2 = inlined_call_operand.vmem [shape: f32[56,1], index: 2, kind: input, shape index: {}]
  %s3 = inlined_call_operand.vmem [shape: f32[56,56], index: 3, kind: input, shape index: {}]
  %s4 = inlined_call_operand.vmem [shape: f32[56,1], index: 4, kind: input, shape index: {}]
  %s5 = inlined_call_operand.vmem [shape: f32[56,56], index: 5, kind: input, shape index: {}]
  %s6 = inlined_call_operand.vmem [shape: f32[56,1], index: 6, kind: input, shape index: {}]
  %s7 = inlined_call_operand.vmem [shape: f32[56,56], index: 7, kind: input, shape index: {}]
  %s8 = inlined_call_operand.vmem [shape: f32[56,1], index: 8, kind: input, shape index: {}]
  %s9 = inlined_call_operand.vmem [shape: f32[1,56], index: 9, kind: input, shape index: {}]
  %s10 = inlined_call_operand.<no memory space> [shape: f32[1,1], index: 10, kind: input, shape index: {}]
  %s11 = inlined_call_operand.vmem [shape: f32[1,256], index: 11, kind: output, shape index: {}]
  %s12 = sld [smem:[#allocation0]]
  $region77: #{pinn_forward.1} parent=0
    _
  %s14 = ssub.s32 1, %s12
  %s15 = scalar_select 0, %s14, %s12
  %v16 = vstv %s10
  %17 = vst [vmem:[#allocation2] sm:$0x1] %v16
  loop: start=0, step=1, limit=4
  $region2: #{pinn_forward.1} parent=0 // loop_pre_header
    _
  $region3: #{pinn_forward.1} parent=0 // loop_header
    %s19 = sphi 0, %s23
    %p20 = scmp.ge.s32.totalorder %s19, 4
    %s29 = sphi 0, %s31
    %s32 = sphi 0, %s29
    %s33 = sphi 0, %s32
    %s49 = sphi 0, %s33
    %s53 = sphi 0, %s53
    %s55 = sphi 0, %s53
    %s56 = sphi 0, %s55
    %s70 = sphi 0, %s56
    %s74 = sphi 0, %s74
    %s76 = sphi 0, %s74
    %s77 = sphi 0, %s76
    %s91 = sphi 0, %s77
    %s95 = sphi 0, %s95
    %s97 = sphi 0, %s95
    %s98 = sphi 0, %s97
    %s112 = sphi 0, %s98
    %s116 = sphi 0, %s116
    %s118 = sphi 0, %s116
    %s119 = sphi 0, %s118
    %s133 = sphi 0, %s119
    %s137 = sphi 0, %s137
    %s139 = sphi 0, %s137
    %s140 = sphi 0, %s139
    %s154 = sphi 0, %s140
    %s158 = sphi 0, %s158
    %s160 = sphi 0, %s158
    %s161 = sphi 0, %s160
    %s175 = sphi 0, %s161
    %s179 = sphi 0, %s179
    %s181 = sphi 0, %s179
    %s182 = sphi 0, %s181
    %s196 = sphi 0, %s182
    %s200 = sphi 0, %s200
    %s202 = sphi 0, %s200
    %s203 = sphi 0, %s202
    %s217 = sphi 0, %s203
    %s221 = sphi 0, %s221
    %s223 = sphi 0, %s221
    %s224 = sphi 0, %s223
    %s238 = sphi 0, %s224
    %s242 = sphi 0, %s242
    %s244 = sphi 0, %s242
    %s245 = sphi 0, %s244
    %s259 = sphi 0, %s245
    %s265 = sphi 0, %s267
    %s268 = sphi 0, %s265
    %s269 = sphi 0, %s268
    %s285 = sphi 0, %s269
  $region4: #{pinn_forward.1} parent=0 // loop_header_branch
    %22 = sbr.rel (%p20) target = $region8
  $region5: #{pinn_forward.1} parent=0 // loop_body
    %s24 = ssub.s32 %s19, 1
    %s25 = ssub.s32 %s19, 2
    %s26 = sadd.s32 %s19, 1
    %s27 = ssub.s32 %s19, %s26
    %p28 = scmp.eq.s32.totalorder %s27, 0
    %s30 = sadd.s32 %s29, 1
    %s31 = scalar_select %p28, %s29, %s30
    %p34 = pneg %p28
    %p35 = scmp.eq.s32.totalorder %s19, 1
    %p36 = por %p34, %p35
    %p37 = scmp.ne.s32.totalorder %s29, %s32
    %p38 = scmp.eq.s32.totalorder %s19, 0
    %p39 = por %p37, %p38
    %p40 = scmp.ne.s32.totalorder %s29, %s32
    %p41 = scmp.eq.s32.totalorder %s24, 1
    %p42 = por %p40, %p41
    %p43 = scmp.ne.s32.totalorder %s32, %s33
    %p44 = scmp.eq.s32.totalorder %s24, 0
    %p45 = por %p43, %p44
    %p46 = scmp.ne.s32.totalorder %s32, %s33
    %p47 = scmp.eq.s32.totalorder %s25, 1
    %p48 = por %p46, %p47
    %p50 = scmp.ne.s32.totalorder %s33, %s49
    %p51 = scmp.eq.s32.totalorder %s25, 0
    %p52 = por %p50, %p51
    %s54 = sadd.s32 %s53, 1
    %p57 = scmp.eq.s32.totalorder %s19, 1
    %p58 = scmp.ne.s32.totalorder %s53, %s55
    %p59 = scmp.eq.s32.totalorder %s19, 0
    %p60 = por %p58, %p59
    %p61 = scmp.ne.s32.totalorder %s53, %s55
    %p62 = scmp.eq.s32.totalorder %s24, 1
    %p63 = por %p61, %p62
    %p64 = scmp.ne.s32.totalorder %s55, %s56
    %p65 = scmp.eq.s32.totalorder %s24, 0
    %p66 = por %p64, %p65
    %p67 = scmp.ne.s32.totalorder %s55, %s56
    %p68 = scmp.eq.s32.totalorder %s25, 1
    %p69 = por %p67, %p68
    %p71 = scmp.ne.s32.totalorder %s56, %s70
    %p72 = scmp.eq.s32.totalorder %s25, 0
    %p73 = por %p71, %p72
    %s75 = sadd.s32 %s74, 1
    %p78 = scmp.eq.s32.totalorder %s19, 1
    %p79 = scmp.ne.s32.totalorder %s74, %s76
    %p80 = scmp.eq.s32.totalorder %s19, 0
    %p81 = por %p79, %p80
    %p82 = scmp.ne.s32.totalorder %s74, %s76
    %p83 = scmp.eq.s32.totalorder %s24, 1
    %p84 = por %p82, %p83
    %p85 = scmp.ne.s32.totalorder %s76, %s77
    %p86 = scmp.eq.s32.totalorder %s24, 0
    %p87 = por %p85, %p86
    %p88 = scmp.ne.s32.totalorder %s76, %s77
    %p89 = scmp.eq.s32.totalorder %s25, 1
    %p90 = por %p88, %p89
    %p92 = scmp.ne.s32.totalorder %s77, %s91
    %p93 = scmp.eq.s32.totalorder %s25, 0
    %p94 = por %p92, %p93
    %s96 = sadd.s32 %s95, 1
    %p99 = scmp.eq.s32.totalorder %s19, 1
    %p100 = scmp.ne.s32.totalorder %s95, %s97
    %p101 = scmp.eq.s32.totalorder %s19, 0
    %p102 = por %p100, %p101
    %p103 = scmp.ne.s32.totalorder %s95, %s97
    %p104 = scmp.eq.s32.totalorder %s24, 1
    %p105 = por %p103, %p104
    %p106 = scmp.ne.s32.totalorder %s97, %s98
    %p107 = scmp.eq.s32.totalorder %s24, 0
    %p108 = por %p106, %p107
    %p109 = scmp.ne.s32.totalorder %s97, %s98
    %p110 = scmp.eq.s32.totalorder %s25, 1
    %p111 = por %p109, %p110
    %p113 = scmp.ne.s32.totalorder %s98, %s112
    %p114 = scmp.eq.s32.totalorder %s25, 0
    %p115 = por %p113, %p114
    %s117 = sadd.s32 %s116, 1
    %p120 = scmp.eq.s32.totalorder %s19, 1
    %p121 = scmp.ne.s32.totalorder %s116, %s118
    %p122 = scmp.eq.s32.totalorder %s19, 0
    %p123 = por %p121, %p122
    %p124 = scmp.ne.s32.totalorder %s116, %s118
    %p125 = scmp.eq.s32.totalorder %s24, 1
    %p126 = por %p124, %p125
    %p127 = scmp.ne.s32.totalorder %s118, %s119
    %p128 = scmp.eq.s32.totalorder %s24, 0
    %p129 = por %p127, %p128
    %p130 = scmp.ne.s32.totalorder %s118, %s119
    %p131 = scmp.eq.s32.totalorder %s25, 1
    %p132 = por %p130, %p131
    %p134 = scmp.ne.s32.totalorder %s119, %s133
    %p135 = scmp.eq.s32.totalorder %s25, 0
    %p136 = por %p134, %p135
    %s138 = sadd.s32 %s137, 1
    %p141 = scmp.eq.s32.totalorder %s19, 1
    %p142 = scmp.ne.s32.totalorder %s137, %s139
    %p143 = scmp.eq.s32.totalorder %s19, 0
    %p144 = por %p142, %p143
    %p145 = scmp.ne.s32.totalorder %s137, %s139
    %p146 = scmp.eq.s32.totalorder %s24, 1
    %p147 = por %p145, %p146
    %p148 = scmp.ne.s32.totalorder %s139, %s140
    %p149 = scmp.eq.s32.totalorder %s24, 0
    %p150 = por %p148, %p149
    %p151 = scmp.ne.s32.totalorder %s139, %s140
    %p152 = scmp.eq.s32.totalorder %s25, 1
    %p153 = por %p151, %p152
    %p155 = scmp.ne.s32.totalorder %s140, %s154
    %p156 = scmp.eq.s32.totalorder %s25, 0
    %p157 = por %p155, %p156
    %s159 = sadd.s32 %s158, 1
    %p162 = scmp.eq.s32.totalorder %s19, 1
    %p163 = scmp.ne.s32.totalorder %s158, %s160
    %p164 = scmp.eq.s32.totalorder %s19, 0
    %p165 = por %p163, %p164
    %p166 = scmp.ne.s32.totalorder %s158, %s160
    %p167 = scmp.eq.s32.totalorder %s24, 1
    %p168 = por %p166, %p167
    %p169 = scmp.ne.s32.totalorder %s160, %s161
    %p170 = scmp.eq.s32.totalorder %s24, 0
    %p171 = por %p169, %p170
    %p172 = scmp.ne.s32.totalorder %s160, %s161
    %p173 = scmp.eq.s32.totalorder %s25, 1
    %p174 = por %p172, %p173
    %p176 = scmp.ne.s32.totalorder %s161, %s175
    %p177 = scmp.eq.s32.totalorder %s25, 0
    %p178 = por %p176, %p177
    %s180 = sadd.s32 %s179, 1
    %p183 = scmp.eq.s32.totalorder %s19, 1
    %p184 = scmp.ne.s32.totalorder %s179, %s181
    %p185 = scmp.eq.s32.totalorder %s19, 0
    %p186 = por %p184, %p185
    %p187 = scmp.ne.s32.totalorder %s179, %s181
    %p188 = scmp.eq.s32.totalorder %s24, 1
    %p189 = por %p187, %p188
    %p190 = scmp.ne.s32.totalorder %s181, %s182
    %p191 = scmp.eq.s32.totalorder %s24, 0
    %p192 = por %p190, %p191
    %p193 = scmp.ne.s32.totalorder %s181, %s182
    %p194 = scmp.eq.s32.totalorder %s25, 1
    %p195 = por %p193, %p194
    %p197 = scmp.ne.s32.totalorder %s182, %s196
    %p198 = scmp.eq.s32.totalorder %s25, 0
    %p199 = por %p197, %p198
    %s201 = sadd.s32 %s200, 1
    %p204 = scmp.eq.s32.totalorder %s19, 1
    %p205 = scmp.ne.s32.totalorder %s200, %s202
    %p206 = scmp.eq.s32.totalorder %s19, 0
    %p207 = por %p205, %p206
    %p208 = scmp.ne.s32.totalorder %s200, %s202
    %p209 = scmp.eq.s32.totalorder %s24, 1
    %p210 = por %p208, %p209
    %p211 = scmp.ne.s32.totalorder %s202, %s203
    %p212 = scmp.eq.s32.totalorder %s24, 0
    %p213 = por %p211, %p212
    %p214 = scmp.ne.s32.totalorder %s202, %s203
    %p215 = scmp.eq.s32.totalorder %s25, 1
    %p216 = por %p214, %p215
    %p218 = scmp.ne.s32.totalorder %s203, %s217
    %p219 = scmp.eq.s32.totalorder %s25, 0
    %p220 = por %p218, %p219
    %s222 = sadd.s32 %s221, 1
    %p225 = scmp.eq.s32.totalorder %s19, 1
    %p226 = scmp.ne.s32.totalorder %s221, %s223
    %p227 = scmp.eq.s32.totalorder %s19, 0
    %p228 = por %p226, %p227
    %p229 = scmp.ne.s32.totalorder %s221, %s223
    %p230 = scmp.eq.s32.totalorder %s24, 1
    %p231 = por %p229, %p230
    %p232 = scmp.ne.s32.totalorder %s223, %s224
    %p233 = scmp.eq.s32.totalorder %s24, 0
    %p234 = por %p232, %p233
    %p235 = scmp.ne.s32.totalorder %s223, %s224
    %p236 = scmp.eq.s32.totalorder %s25, 1
    %p237 = por %p235, %p236
    %p239 = scmp.ne.s32.totalorder %s224, %s238
    %p240 = scmp.eq.s32.totalorder %s25, 0
    %p241 = por %p239, %p240
    %s243 = sadd.s32 %s242, 1
    %p246 = scmp.eq.s32.totalorder %s19, 1
    %p247 = scmp.ne.s32.totalorder %s242, %s244
    %p248 = scmp.eq.s32.totalorder %s19, 0
    %p249 = por %p247, %p248
    %p250 = scmp.ne.s32.totalorder %s242, %s244
    %p251 = scmp.eq.s32.totalorder %s24, 1
    %p252 = por %p250, %p251
    %p253 = scmp.ne.s32.totalorder %s244, %s245
    %p254 = scmp.eq.s32.totalorder %s24, 0
    %p255 = por %p253, %p254
    %p256 = scmp.ne.s32.totalorder %s244, %s245
    %p257 = scmp.eq.s32.totalorder %s25, 1
    %p258 = por %p256, %p257
    %p260 = scmp.ne.s32.totalorder %s245, %s259
    %p261 = scmp.eq.s32.totalorder %s25, 0
    %p262 = por %p260, %p261
    %s263 = ssub.s32 %s19, %s26
    %p264 = scmp.eq.s32.totalorder %s263, 0
    %s266 = sadd.s32 %s265, 1
    %s267 = scalar_select %p264, %s265, %s266
    %p270 = pneg %p264
    %p271 = scmp.eq.s32.totalorder %s19, 1
    %p272 = por %p270, %p271
    %p273 = scmp.ne.s32.totalorder %s265, %s268
    %p274 = scmp.eq.s32.totalorder %s19, 0
    %p275 = por %p273, %p274
    %p276 = scmp.ne.s32.totalorder %s265, %s268
    %p277 = scmp.eq.s32.totalorder %s24, 1
    %p278 = por %p276, %p277
    %p279 = scmp.ne.s32.totalorder %s268, %s269
    %p280 = scmp.eq.s32.totalorder %s24, 0
    %p281 = por %p279, %p280
    %p282 = scmp.ne.s32.totalorder %s268, %s269
    %p283 = scmp.eq.s32.totalorder %s25, 1
    %p284 = por %p282, %p283
    %p286 = scmp.ne.s32.totalorder %s269, %s285
    %p287 = scmp.eq.s32.totalorder %s25, 0
    %p288 = por %p286, %p287
    %p289 = scmp.le.s32.totalorder 1, %s19
    %p290 = scmp.lt.s32.totalorder %s19, 3
    %p291 = pnand %p289, %p290
    %p292 = pneg %p291
    // Predicated region
    $region9: #{pinn_forward.1} parent=5 // pred_check
      _
    $region10: #{pinn_forward.1} parent=5 // pred_check_branch
      %294 = sbr.rel (%p291) target = $region12
    $region11: #{pinn_forward.1} parent=5 // pred_region
      %s295 = ssub.s32 %s19, 1
      // Predicated region
      $region13: #{pinn_forward.1} parent=11 // pred_check
        %p296 = pneg %p66
      $region14: #{pinn_forward.1} parent=11 // pred_check_branch
        %298 = sbr.rel (%p296) target = $region16
      $region15: #{pinn_forward.1} parent=11 // pred_region
        _
      $region16: #{pinn_forward.1} parent=11 // pred_fallthru
        _
      // Predicated region
      $region17: #{pinn_forward.1} parent=11 // pred_check
        %p299 = pneg %p87
      $region18: #{pinn_forward.1} parent=11 // pred_check_branch
        %301 = sbr.rel (%p299) target = $region20
      $region19: #{pinn_forward.1} parent=11 // pred_region
        _
      $region20: #{pinn_forward.1} parent=11 // pred_fallthru
        _
      // Predicated region
      $region21: #{pinn_forward.1} parent=11 // pred_check
        %p302 = pneg %p108
      $region22: #{pinn_forward.1} parent=11 // pred_check_branch
        %304 = sbr.rel (%p302) target = $region24
      $region23: #{pinn_forward.1} parent=11 // pred_region
        _
      $region24: #{pinn_forward.1} parent=11 // pred_fallthru
        _
      // Predicated region
      $region25: #{pinn_forward.1} parent=11 // pred_check
        %p305 = pneg %p129
      $region26: #{pinn_forward.1} parent=11 // pred_check_branch
        %307 = sbr.rel (%p305) target = $region28
      $region27: #{pinn_forward.1} parent=11 // pred_region
        _
      $region28: #{pinn_forward.1} parent=11 // pred_fallthru
        _
      // Predicated region
      $region29: #{pinn_forward.1} parent=11 // pred_check
        %p308 = pneg %p150
      $region30: #{pinn_forward.1} parent=11 // pred_check_branch
        %310 = sbr.rel (%p308) target = $region32
      $region31: #{pinn_forward.1} parent=11 // pred_region
        _
      $region32: #{pinn_forward.1} parent=11 // pred_fallthru
        _
      // Predicated region
      $region33: #{pinn_forward.1} parent=11 // pred_check
        %p311 = pneg %p171
      $region34: #{pinn_forward.1} parent=11 // pred_check_branch
        %313 = sbr.rel (%p311) target = $region36
      $region35: #{pinn_forward.1} parent=11 // pred_region
        _
      $region36: #{pinn_forward.1} parent=11 // pred_fallthru
        _
      // Predicated region
      $region37: #{pinn_forward.1} parent=11 // pred_check
        %p314 = pneg %p192
      $region38: #{pinn_forward.1} parent=11 // pred_check_branch
        %316 = sbr.rel (%p314) target = $region40
      $region39: #{pinn_forward.1} parent=11 // pred_region
        _
      $region40: #{pinn_forward.1} parent=11 // pred_fallthru
        _
      // Predicated region
      $region41: #{pinn_forward.1} parent=11 // pred_check
        %p317 = pneg %p213
      $region42: #{pinn_forward.1} parent=11 // pred_check_branch
        %319 = sbr.rel (%p317) target = $region44
      $region43: #{pinn_forward.1} parent=11 // pred_region
        _
      $region44: #{pinn_forward.1} parent=11 // pred_fallthru
        _
      // Predicated region
      $region45: #{pinn_forward.1} parent=11 // pred_check
        %p320 = pneg %p234
      $region46: #{pinn_forward.1} parent=11 // pred_check_branch
        %322 = sbr.rel (%p320) target = $region48
      $region47: #{pinn_forward.1} parent=11 // pred_region
        _
      $region48: #{pinn_forward.1} parent=11 // pred_fallthru
        _
      // Predicated region
      $region49: #{pinn_forward.1} parent=11 // pred_check
        %p323 = pneg %p255
      $region50: #{pinn_forward.1} parent=11 // pred_check_branch
        %325 = sbr.rel (%p323) target = $region52
      $region51: #{pinn_forward.1} parent=11 // pred_region
        _
      $region52: #{pinn_forward.1} parent=11 // pred_fallthru
        _
    $region12: #{pinn_forward.1} parent=5 // pred_fallthru
      _
    %p326 = scmp.lt.s32.totalorder %s19, 2
    // Predicated region
    $region53: #{pinn_forward.1} parent=5 // pred_check
      %p327 = pneg %p326
    $region54: #{pinn_forward.1} parent=5 // pred_check_branch
      %329 = sbr.rel (%p327) target = $region56
    $region55: #{pinn_forward.1} parent=5 // pred_region
      // Predicated region
      $region57: #{pinn_forward.1} parent=55 // pred_check
        %p330 = pneg %p39
      $region58: #{pinn_forward.1} parent=55 // pred_check_branch
        %332 = sbr.rel (%p330) target = $region60
      $region59: #{pinn_forward.1} parent=55 // pred_region
        %p333 = scmp.lt.s32.totalorder %s19, 1
        %s334 = scalar_select %p333, %s19, 1
        %s335 = smul.addr %s334, 2
        %s336 = scalar_lea.vmem %s0, %s335
      $region60: #{pinn_forward.1} parent=55 // pred_fallthru
        _
    $region56: #{pinn_forward.1} parent=5 // pred_fallthru
      _
    %p337 = scmp.le.s32.totalorder 1, %s19
    %p338 = scmp.lt.s32.totalorder %s19, 3
    %p339 = pnand %p337, %p338
    %p340 = pneg %p339
    // Predicated region
    $region61: #{pinn_forward.1} parent=5 // pred_check
      _
    $region62: #{pinn_forward.1} parent=5 // pred_check_branch
      %342 = sbr.rel (%p339) target = $region64
    $region63: #{pinn_forward.1} parent=5 // pred_region
      %s343 = ssub.s32 %s19, 1
      %p344 = scmp.lt.s32.totalorder %s24, 1
      %s345 = scalar_select %p344, %s24, 1
      %s346 = smul.addr %s345, 2
      %s347 = scalar_lea.vmem %s0, %s346
      %p348 = pneg %p45
      %p349 = pneg %p42
      %p350 = pneg %p66
      %p351 = pneg %p63
      %p352 = pneg %p87
      %p353 = pneg %p84
      %p354 = pneg %p108
      %p355 = pneg %p105
      %p356 = pneg %p129
      %p357 = pneg %p126
      %p358 = pneg %p150
      %p359 = pneg %p147
      %p360 = pneg %p171
      %p361 = pneg %p168
      %p362 = pneg %p192
      %p363 = pneg %p189
      %p364 = pneg %p213
      %p365 = pneg %p210
      %p366 = pneg %p234
      %p367 = pneg %p231
      %p368 = pneg %p255
      %p369 = pneg %p252
      %p370 = pneg %p281
      %p371 = pneg %p278
      %p372 = scmp.lt.s32.totalorder %s24, 1
      %s373 = scalar_select %p372, %s24, 1
      %s374 = scalar_lea.vmem %s11, %s373
      %p375 = scmp.lt.s32.totalorder %s24, 1
      %s376 = scalar_select %p375, %s24, 1
      %s377 = smul.addr %s376, 2
      %s378 = scalar_lea.vmem %s0, %s377
      %p379 = scmp.lt.s32.totalorder %s24, 1
      %s380 = scalar_select %p379, %s24, 1
      %s381 = scalar_lea.vmem %s11, %s380
      %v382 = vld [vmem:[%s378] sm:$0x3]
      %v383 = vld [vmem:[%s1] sm:$0xff]
      %v384 = vld [vmem:[%s1 + $0x8] sm:$0xff]
      %v385 = vld [vmem:[%s1 + $0x10] sm:$0xff]
      %v386 = vld [vmem:[%s1 + $0x18] sm:$0xff]
      %v387 = vld [vmem:[%s1 + $0x20] sm:$0xff]
      %v388 = vld [vmem:[%s1 + $0x28] sm:$0xff]
      %v389 = vld [vmem:[%s1 + $0x30] sm:$0xff]
      %v390 = vld [vmem:[%s2] sm:$0xff]
      %v391 = vld [vmem:[%s2 + $0x8] sm:$0xff]
      %v392 = vld [vmem:[%s2 + $0x10] sm:$0xff]
      %v393 = vld [vmem:[%s2 + $0x18] sm:$0xff]
      %v394 = vld [vmem:[%s2 + $0x20] sm:$0xff]
      %v395 = vld [vmem:[%s2 + $0x28] sm:$0xff]
      %v396 = vld [vmem:[%s2 + $0x30] sm:$0xff]
      %398 = vset.pattern.permute.xlu0 0
      %399 = vperm.xlu0 %398, %v390
      %v400 = vpop.permute.xlu0 %399
      %403 = vset.pattern.permute.xlu0 0
      %404 = vperm.xlu0 %403, %v391
      %v405 = vpop.permute.xlu0 %404
      %408 = vset.pattern.permute.xlu0 0
      %409 = vperm.xlu0 %408, %v392
      %v410 = vpop.permute.xlu0 %409
      %413 = vset.pattern.permute.xlu0 0
      %414 = vperm.xlu0 %413, %v393
      %v415 = vpop.permute.xlu0 %414
      %418 = vset.pattern.permute.xlu0 0
      %419 = vperm.xlu0 %418, %v394
      %v420 = vpop.permute.xlu0 %419
      %423 = vset.pattern.permute.xlu0 0
      %424 = vperm.xlu0 %423, %v395
      %v425 = vpop.permute.xlu0 %424
      %428 = vset.pattern.permute.xlu0 0
      %429 = vperm.xlu0 %428, %v396
      %v430 = vpop.permute.xlu0 %429
      %vm432 = vcmask 15360
      %v434 = vsel %vm432, %v383, 0
      %v437 = vsel %vm432, %v384, 0
      %v440 = vsel %vm432, %v385, 0
      %v443 = vsel %vm432, %v386, 0
      %v446 = vsel %vm432, %v387, 0
      %v449 = vsel %vm432, %v388, 0
      %v452 = vsel %vm432, %v389, 0
      %vm454 = vcmask 1041408
      %v456 = vsel %vm454, %v382, 0
      %458 = vmatprep.subr.mxu0 0.0
      %459 = vmatpush1.msra.mxu0 %v456
      %460 = vmatprep.subr.mxu0 0.0
      %461 = vmatpush1.msra.mxu0 0.0
      %462 = vmatprep.subr.mxu0 0.0
      %463 = vmatpush1.msra.mxu0 0.0
      %464 = vmatprep.subr.mxu0 0.0
      %465 = vmatpush1.msra.mxu0 0.0
      %466 = vmatprep.subr.mxu0 0.0
      %467 = vmatpush1.msra.mxu0 0.0
      %468 = vmatprep.subr.mxu0 0.0
      %469 = vmatpush1.msra.mxu0 0.0
      %470 = vmatprep.subr.mxu0 0.0
      %471 = vmatpush1.msra.mxu0 0.0
      %472 = vmatprep.subr.mxu0 0.0
      %473 = vmatpush1.msra.mxu0 0.0
      %474 = vmatprep.subr.mxu0 0.0
      %475 = vmatpush1.msra.mxu0 0.0
      %476 = vmatprep.subr.mxu0 0.0
      %477 = vmatpush1.msra.mxu0 0.0
      %478 = vmatprep.subr.mxu0 0.0
      %479 = vmatpush1.msra.mxu0 0.0
      %480 = vmatprep.subr.mxu0 0.0
      %481 = vmatpush1.msra.mxu0 0.0
      %482 = vmatprep.subr.mxu0 0.0
      %483 = vmatpush1.msra.mxu0 0.0
      %484 = vmatprep.subr.mxu0 0.0
      %485 = vmatpush1.msra.mxu0 0.0
      %486 = vmatprep.subr.mxu0 0.0
      %487 = vmatpush1.msra.mxu0 0.0
      %488 = vmatprep.subr.mxu0 0.0
      %489 = vmatpush1.msra.mxu0 0.0
      %490 = vmatprep.subr.mxu0 0.0
      %491 = vmatpush1.msra.mxu0 0.0
      %492 = vmatprep.subr.mxu0 0.0
      %493 = vmatpush1.msra.mxu0 0.0
      %494 = vmatprep.subr.mxu0 0.0
      %495 = vmatpush1.msra.mxu0 0.0
      %496 = vmatprep.subr.mxu0 0.0
      %497 = vmatpush1.msra.mxu0 0.0
      %498 = vmatprep.subr.mxu0 0.0
      %499 = vmatpush1.msra.mxu0 0.0
      %500 = vmatprep.subr.mxu0 0.0
      %501 = vmatpush1.msra.mxu0 0.0
      %502 = vmatprep.subr.mxu0 0.0
      %503 = vmatpush1.msra.mxu0 0.0
      %504 = vmatprep.subr.mxu0 0.0
      %505 = vmatpush1.msra.mxu0 0.0
      %506 = vmatprep.subr.mxu0 0.0
      %507 = vmatpush1.msra.mxu0 0.0
      %508 = vmatprep.subr.mxu0 0.0
      %509 = vmatpush1.msra.mxu0 0.0
      %510 = vmatprep.subr.mxu0 0.0
      %511 = vmatpush1.msra.mxu0 0.0
      %512 = vmatprep.subr.mxu0 0.0
      %513 = vmatpush1.msra.mxu0 0.0
      %514 = vmatprep.subr.mxu0 0.0
      %515 = vmatpush1.msra.mxu0 0.0
      %516 = vmatprep.subr.mxu0 0.0
      %517 = vmatpush1.msra.mxu0 0.0
      %518 = vmatprep.subr.mxu0 0.0
      %519 = vmatpush1.msra.mxu0 0.0
      %520 = vmatprep.subr.mxu0 0.0
      %521 = vmatpush1.msra.mxu0 0.0
      %522 = vmatprep.mubr.f32.mxu0 0.0
      %523 = vmatmul.mubr.f32.gmra.mrb[0].mxu0 %v434
      %v524 = vpop.f32.mrb[0].mxu0
      %v525 = vadd.f32 %v400, %v524
      %v526 = vpop.f32.mrb[0].mxu0
      %527 = vmatprep.mubr.f32.mxu0 0.0
      %528 = vmatmul.mubr.f32.gmra.mrb[0].mxu0 %v437
      %v529 = vpop.f32.mrb[0].mxu0
      %v530 = vadd.f32 %v405, %v529
      %v531 = vpop.f32.mrb[0].mxu0
      %532 = vmatprep.mubr.f32.mxu0 0.0
      %533 = vmatmul.mubr.f32.gmra.mrb[0].mxu0 %v440
      %v534 = vpop.f32.mrb[0].mxu0
      %v535 = vadd.f32 %v410, %v534
      %v536 = vpop.f32.mrb[0].mxu0
      %537 = vmatprep.mubr.f32.mxu0 0.0
      %538 = vmatmul.mubr.f32.gmra.mrb[0].mxu0 %v443
      %v539 = vpop.f32.mrb[0].mxu0
      %v540 = vadd.f32 %v415, %v539
      %v541 = vpop.f32.mrb[0].mxu0
      %542 = vmatprep.mubr.f32.mxu0 0.0
      %543 = vmatmul.mubr.f32.gmra.mrb[0].mxu0 %v446
      %v544 = vpop.f32.mrb[0].mxu0
      %v545 = vadd.f32 %v420, %v544
      %v546 = vpop.f32.mrb[0].mxu0
      %547 = vmatprep.mubr.f32.mxu0 0.0
      %548 = vmatmul.mubr.f32.gmra.mrb[0].mxu0 %v449
      %v549 = vpop.f32.mrb[0].mxu0
      %v550 = vadd.f32 %v425, %v549
      %v551 = vpop.f32.mrb[0].mxu0
      %552 = vmatprep.mubr.f32.mxu0 0.0
      %553 = vmatmul.mubr.f32.gmra.mrb[0].mxu0 %v452
      %v554 = vpop.f32.mrb[0].mxu0
      %v555 = vadd.f32 %v430, %v554
      %v556 = vpop.f32.mrb[0].mxu0
      %557 = vdwg.mxu0
      %v558 = vtanh.pop %v525
      %v559 = vtanh.pop %v530
      %v560 = vtanh.pop %v535
      %v561 = vtanh.pop %v540
      %v562 = vtanh.pop %v545
      %v563 = vtanh.pop %v550
      %v564 = vtanh.pop %v555
      %v565 = vld [vmem:[%s3] sm:$0xff]
      %v566 = vld [vmem:[%s3 + $0x8] sm:$0xff]
      %v567 = vld [vmem:[%s3 + $0x10] sm:$0xff]
      %v568 = vld [vmem:[%s3 + $0x18] sm:$0xff]
      %v569 = vld [vmem:[%s3 + $0x20] sm:$0xff]
      %v570 = vld [vmem:[%s3 + $0x28] sm:$0xff]
      %v571 = vld [vmem:[%s3 + $0x30] sm:$0xff]
      %v572 = vld [vmem:[%s4] sm:$0xff]
      %v573 = vld [vmem:[%s4 + $0x8] sm:$0xff]
      %v574 = vld [vmem:[%s4 + $0x10] sm:$0xff]
      %v575 = vld [vmem:[%s4 + $0x18] sm:$0xff]
      %v576 = vld [vmem:[%s4 + $0x20] sm:$0xff]
      %v577 = vld [vmem:[%s4 + $0x28] sm:$0xff]
      %v578 = vld [vmem:[%s4 + $0x30] sm:$0xff]
      %580 = vset.pattern.permute.xlu0 0
      %581 = vperm.xlu0 %580, %v572
      %v582 = vpop.permute.xlu0 %581
      %585 = vset.pattern.permute.xlu0 0
      %586 = vperm.xlu0 %585, %v573
      %v587 = vpop.permute.xlu0 %586
      %590 = vset.pattern.permute.xlu0 0
      %591 = vperm.xlu0 %590, %v574
      %v592 = vpop.permute.xlu0 %591
      %595 = vset.pattern.permute.xlu0 0
      %596 = vperm.xlu0 %595, %v575
      %v597 = vpop.permute.xlu0 %596
      %600 = vset.pattern.permute.xlu0 0
      %601 = vperm.xlu0 %600, %v576
      %v602 = vpop.permute.xlu0 %601
      %605 = vset.pattern.permute.xlu0 0
      %606 = vperm.xlu0 %605, %v577
      %v607 = vpop.permute.xlu0 %606
      %610 = vset.pattern.permute.xlu0 0
      %611 = vperm.xlu0 %610, %v578
      %v612 = vpop.permute.xlu0 %611
      %vm614 = vcmask 457728
      %v616 = vsel %vm614, %v565, 0
      %v619 = vsel %vm614, %v566, 0
      %v622 = vsel %vm614, %v567, 0
      %v625 = vsel %vm614, %v568, 0
      %v628 = vsel %vm614, %v569, 0
      %v631 = vsel %vm614, %v570, 0
      %v634 = vsel %vm614, %v571, 0
      %636 = vmatprep.subr.mxu0 0.0
      %637 = vmatpush1.msra.mxu0 %v558
      %638 = vmatprep.subr.mxu0 0.0
      %639 = vmatpush1.msra.mxu0 %v559
      %640 = vmatprep.subr.mxu0 0.0
      %641 = vmatpush1.msra.mxu0 %v560
      %642 = vmatprep.subr.mxu0 0.0
      %643 = vmatpush1.msra.mxu0 %v561
      %644 = vmatprep.subr.mxu0 0.0
      %645 = vmatpush1.msra.mxu0 %v562
      %646 = vmatprep.subr.mxu0 0.0
      %647 = vmatpush1.msra.mxu0 %v563
      %648 = vmatprep.subr.mxu0 0.0
      %649 = vmatpush1.msra.mxu0 %v564
      %650 = vmatprep.subr.mxu0 0.0
      %651 = vmatpush1.msra.mxu0 0.0
      %652 = vmatprep.subr.mxu0 0.0
      %653 = vmatpush1.msra.mxu0 0.0
      %654 = vmatprep.subr.mxu0 0.0
      %655 = vmatpush1.msra.mxu0 0.0
      %656 = vmatprep.subr.mxu0 0.0
      %657 = vmatpush1.msra.mxu0 0.0
      %658 = vmatprep.subr.mxu0 0.0
      %659 = vmatpush1.msra.mxu0 0.0
      %660 = vmatprep.subr.mxu0 0.0
      %661 = vmatpush1.msra.mxu0 0.0
      %662 = vmatprep.subr.mxu0 0.0
      %663 = vmatpush1.msra.mxu0 0.0
      %664 = vmatprep.subr.mxu0 0.0
      %665 = vmatpush1.msra.mxu0 0.0
      %666 = vmatprep.subr.mxu0 0.0
      %667 = vmatpush1.msra.mxu0 0.0
      %668 = vmatprep.subr.mxu0 0.0
      %669 = vmatpush1.msra.mxu0 0.0
      %670 = vmatprep.subr.mxu0 0.0
      %671 = vmatpush1.msra.mxu0 0.0
      %672 = vmatprep.subr.mxu0 0.0
      %673 = vmatpush1.msra.mxu0 0.0
      %674 = vmatprep.subr.mxu0 0.0
      %675 = vmatpush1.msra.mxu0 0.0
      %676 = vmatprep.subr.mxu0 0.0
      %677 = vmatpush1.msra.mxu0 0.0
      %678 = vmatprep.subr.mxu0 0.0
      %679 = vmatpush1.msra.mxu0 0.0
      %680 = vmatprep.subr.mxu0 0.0
      %681 = vmatpush1.msra.mxu0 0.0
      %682 = vmatprep.subr.mxu0 0.0
      %683 = vmatpush1.msra.mxu0 0.0
      %684 = vmatprep.subr.mxu0 0.0
      %685 = vmatpush1.msra.mxu0 0.0
      %686 = vmatprep.subr.mxu0 0.0
      %687 = vmatpush1.msra.mxu0 0.0
      %688 = vmatprep.subr.mxu0 0.0
      %689 = vmatpush1.msra.mxu0 0.0
      %690 = vmatprep.subr.mxu0 0.0
      %691 = vmatpush1.msra.mxu0 0.0
      %692 = vmatprep.subr.mxu0 0.0
      %693 = vmatpush1.msra.mxu0 0.0
      %694 = vmatprep.subr.mxu0 0.0
      %695 = vmatpush1.msra.mxu0 0.0
      %696 = vmatprep.subr.mxu0 0.0
      %697 = vmatpush1.msra.mxu0 0.0
      %698 = vmatprep.subr.mxu0 0.0
      %699 = vmatpush1.msra.mxu0 0.0
      %700 = vmatprep.mubr.f32.mxu0 0.0
      %701 = vmatmul.mubr.f32.gmra.mrb[0].mxu0 %v616
      %v702 = vpop.f32.mrb[0].mxu0
      %v703 = vadd.f32 %v582, %v702
      %v704 = vpop.f32.mrb[0].mxu0
      %705 = vmatprep.mubr.f32.mxu0 0.0
      %706 = vmatmul.mubr.f32.gmra.mrb[0].mxu0 %v619
      %v707 = vpop.f32.mrb[0].mxu0
      %v708 = vadd.f32 %v587, %v707
      %v709 = vpop.f32.mrb[0].mxu0
      %710 = vmatprep.mubr.f32.mxu0 0.0
      %711 = vmatmul.mubr.f32.gmra.mrb[0].mxu0 %v622
      %v712 = vpop.f32.mrb[0].mxu0
      %v713 = vadd.f32 %v592, %v712
      %v714 = vpop.f32.mrb[0].mxu0
      %715 = vmatprep.mubr.f32.mxu0 0.0
      %716 = vmatmul.mubr.f32.gmra.mrb[0].mxu0 %v625
      %v717 = vpop.f32.mrb[0].mxu0
      %v718 = vadd.f32 %v597, %v717
      %v719 = vpop.f32.mrb[0].mxu0
      %720 = vmatprep.mubr.f32.mxu0 0.0
      %721 = vmatmul.mubr.f32.gmra.mrb[0].mxu0 %v628
      %v722 = vpop.f32.mrb[0].mxu0
      %v723 = vadd.f32 %v602, %v722
      %v724 = vpop.f32.mrb[0].mxu0
      %725 = vmatprep.mubr.f32.mxu0 0.0
      %726 = vmatmul.mubr.f32.gmra.mrb[0].mxu0 %v631
      %v727 = vpop.f32.mrb[0].mxu0
      %v728 = vadd.f32 %v607, %v727
      %v729 = vpop.f32.mrb[0].mxu0
      %730 = vmatprep.mubr.f32.mxu0 0.0
      %731 = vmatmul.mubr.f32.gmra.mrb[0].mxu0 %v634
      %v732 = vpop.f32.mrb[0].mxu0
      %v733 = vadd.f32 %v612, %v732
      %v734 = vpop.f32.mrb[0].mxu0
      %735 = vdwg.mxu0
      %v736 = vtanh.pop %v703
      %v737 = vtanh.pop %v708
      %v738 = vtanh.pop %v713
      %v739 = vtanh.pop %v718
      %v740 = vtanh.pop %v723
      %v741 = vtanh.pop %v728
      %v742 = vtanh.pop %v733
      %v743 = vld [vmem:[%s5] sm:$0xff]
      %v744 = vld [vmem:[%s5 + $0x8] sm:$0xff]
      %v745 = vld [vmem:[%s5 + $0x10] sm:$0xff]
      %v746 = vld [vmem:[%s5 + $0x18] sm:$0xff]
      %v747 = vld [vmem:[%s5 + $0x20] sm:$0xff]
      %v748 = vld [vmem:[%s5 + $0x28] sm:$0xff]
      %v749 = vld [vmem:[%s5 + $0x30] sm:$0xff]
      %v750 = vld [vmem:[%s6] sm:$0xff]
      %v751 = vld [vmem:[%s6 + $0x8] sm:$0xff]
      %v752 = vld [vmem:[%s6 + $0x10] sm:$0xff]
      %v753 = vld [vmem:[%s6 + $0x18] sm:$0xff]
      %v754 = vld [vmem:[%s6 + $0x20] sm:$0xff]
      %v755 = vld [vmem:[%s6 + $0x28] sm:$0xff]
      %v756 = vld [vmem:[%s6 + $0x30] sm:$0xff]
      %758 = vset.pattern.permute.xlu0 0
      %759 = vperm.xlu0 %758, %v750
      %v760 = vpop.permute.xlu0 %759
      %763 = vset.pattern.permute.xlu0 0
      %764 = vperm.xlu0 %763, %v751
      %v765 = vpop.permute.xlu0 %764
      %768 = vset.pattern.permute.xlu0 0
      %769 = vperm.xlu0 %768, %v752
      %v770 = vpop.permute.xlu0 %769
      %773 = vset.pattern.permute.xlu0 0
      %774 = vperm.xlu0 %773, %v753
      %v775 = vpop.permute.xlu0 %774
      %778 = vset.pattern.permute.xlu0 0
      %779 = vperm.xlu0 %778, %v754
      %v780 = vpop.permute.xlu0 %779
      %783 = vset.pattern.permute.xlu0 0
      %784 = vperm.xlu0 %783, %v755
      %v785 = vpop.permute.xlu0 %784
      %788 = vset.pattern.permute.xlu0 0
      %789 = vperm.xlu0 %788, %v756
      %v790 = vpop.permute.xlu0 %789
      %v793 = vsel %vm614, %v743, 0
      %v796 = vsel %vm614, %v744, 0
      %v799 = vsel %vm614, %v745, 0
      %v802 = vsel %vm614, %v746, 0
      %v805 = vsel %vm614, %v747, 0
      %v808 = vsel %vm614, %v748, 0
      %v811 = vsel %vm614, %v749, 0
      %813 = vmatprep.subr.mxu0 0.0
      %814 = vmatpush1.msra.mxu0 %v736
      %815 = vmatprep.subr.mxu0 0.0
      %816 = vmatpush1.msra.mxu0 %v737
      %817 = vmatprep.subr.mxu0 0.0
      %818 = vmatpush1.msra.mxu0 %v738
      %819 = vmatprep.subr.mxu0 0.0
      %820 = vmatpush1.msra.mxu0 %v739
      %821 = vmatprep.subr.mxu0 0.0
      %822 = vmatpush1.msra.mxu0 %v740
      %823 = vmatprep.subr.mxu0 0.0
      %824 = vmatpush1.msra.mxu0 %v741
      %825 = vmatprep.subr.mxu0 0.0
      %826 = vmatpush1.msra.mxu0 %v742
      %827 = vmatprep.subr.mxu0 0.0
      %828 = vmatpush1.msra.mxu0 0.0
      %829 = vmatprep.subr.mxu0 0.0
      %830 = vmatpush1.msra.mxu0 0.0
      %831 = vmatprep.subr.mxu0 0.0
      %832 = vmatpush1.msra.mxu0 0.0
      %833 = vmatprep.subr.mxu0 0.0
      %834 = vmatpush1.msra.mxu0 0.0
      %835 = vmatprep.subr.mxu0 0.0
      %836 = vmatpush1.msra.mxu0 0.0
      %837 = vmatprep.subr.mxu0 0.0
      %838 = vmatpush1.msra.mxu0 0.0
      %839 = vmatprep.subr.mxu0 0.0
      %840 = vmatpush1.msra.mxu0 0.0
      %841 = vmatprep.subr.mxu0 0.0
      %842 = vmatpush1.msra.mxu0 0.0
      %843 = vmatprep.subr.mxu0 0.0
      %844 = vmatpush1.msra.mxu0 0.0
      %845 = vmatprep.subr.mxu0 0.0
      %846 = vmatpush1.msra.mxu0 0.0
      %847 = vmatprep.subr.mxu0 0.0
      %848 = vmatpush1.msra.mxu0 0.0
      %849 = vmatprep.subr.mxu0 0.0
      %850 = vmatpush1.msra.mxu0 0.0
      %851 = vmatprep.subr.mxu0 0.0
      %852 = vmatpush1.msra.mxu0 0.0
      %853 = vmatprep.subr.mxu0 0.0
      %854 = vmatpush1.msra.mxu0 0.0
      %855 = vmatprep.subr.mxu0 0.0
      %856 = vmatpush1.msra.mxu0 0.0
      %857 = vmatprep.subr.mxu0 0.0
      %858 = vmatpush1.msra.mxu0 0.0
      %859 = vmatprep.subr.mxu0 0.0
      %860 = vmatpush1.msra.mxu0 0.0
      %861 = vmatprep.subr.mxu0 0.0
      %862 = vmatpush1.msra.mxu0 0.0
      %863 = vmatprep.subr.mxu0 0.0
      %864 = vmatpush1.msra.mxu0 0.0
      %865 = vmatprep.subr.mxu0 0.0
      %866 = vmatpush1.msra.mxu0 0.0
      %867 = vmatprep.subr.mxu0 0.0
      %868 = vmatpush1.msra.mxu0 0.0
      %869 = vmatprep.subr.mxu0 0.0
      %870 = vmatpush1.msra.mxu0 0.0
      %871 = vmatprep.subr.mxu0 0.0
      %872 = vmatpush1.msra.mxu0 0.0
      %873 = vmatprep.subr.mxu0 0.0
      %874 = vmatpush1.msra.mxu0 0.0
      %875 = vmatprep.subr.mxu0 0.0
      %876 = vmatpush1.msra.mxu0 0.0
      %877 = vmatprep.mubr.f32.mxu0 0.0
      %878 = vmatmul.mubr.f32.gmra.mrb[0].mxu0 %v793
      %v879 = vpop.f32.mrb[0].mxu0
      %v880 = vadd.f32 %v760, %v879
      %v881 = vpop.f32.mrb[0].mxu0
      %882 = vmatprep.mubr.f32.mxu0 0.0
      %883 = vmatmul.mubr.f32.gmra.mrb[0].mxu0 %v796
      %v884 = vpop.f32.mrb[0].mxu0
      %v885 = vadd.f32 %v765, %v884
      %v886 = vpop.f32.mrb[0].mxu0
      %887 = vmatprep.mubr.f32.mxu0 0.0
      %888 = vmatmul.mubr.f32.gmra.mrb[0].mxu0 %v799
      %v889 = vpop.f32.mrb[0].mxu0
      %v890 = vadd.f32 %v770, %v889
      %v891 = vpop.f32.mrb[0].mxu0
      %892 = vmatprep.mubr.f32.mxu0 0.0
      %893 = vmatmul.mubr.f32.gmra.mrb[0].mxu0 %v802
      %v894 = vpop.f32.mrb[0].mxu0
      %v895 = vadd.f32 %v775, %v894
      %v896 = vpop.f32.mrb[0].mxu0
      %897 = vmatprep.mubr.f32.mxu0 0.0
      %898 = vmatmul.mubr.f32.gmra.mrb[0].mxu0 %v805
      %v899 = vpop.f32.mrb[0].mxu0
      %v900 = vadd.f32 %v780, %v899
      %v901 = vpop.f32.mrb[0].mxu0
      %902 = vmatprep.mubr.f32.mxu0 0.0
      %903 = vmatmul.mubr.f32.gmra.mrb[0].mxu0 %v808
      %v904 = vpop.f32.mrb[0].mxu0
      %v905 = vadd.f32 %v785, %v904
      %v906 = vpop.f32.mrb[0].mxu0
      %907 = vmatprep.mubr.f32.mxu0 0.0
      %908 = vmatmul.mubr.f32.gmra.mrb[0].mxu0 %v811
      %v909 = vpop.f32.mrb[0].mxu0
      %v910 = vadd.f32 %v790, %v909
      %v911 = vpop.f32.mrb[0].mxu0
      %912 = vdwg.mxu0
      %v913 = vtanh.pop %v880
      %v914 = vtanh.pop %v885
      %v915 = vtanh.pop %v890
      %v916 = vtanh.pop %v895
      %v917 = vtanh.pop %v900
      %v918 = vtanh.pop %v905
      %v919 = vtanh.pop %v910
      %v920 = vld [vmem:[%s7] sm:$0xff]
      %v921 = vld [vmem:[%s7 + $0x8] sm:$0xff]
      %v922 = vld [vmem:[%s7 + $0x10] sm:$0xff]
      %v923 = vld [vmem:[%s7 + $0x18] sm:$0xff]
      %v924 = vld [vmem:[%s7 + $0x20] sm:$0xff]
      %v925 = vld [vmem:[%s7 + $0x28] sm:$0xff]
      %v926 = vld [vmem:[%s7 + $0x30] sm:$0xff]
      %v927 = vld [vmem:[%s8] sm:$0xff]
      %v928 = vld [vmem:[%s8 + $0x8] sm:$0xff]
      %v929 = vld [vmem:[%s8 + $0x10] sm:$0xff]
      %v930 = vld [vmem:[%s8 + $0x18] sm:$0xff]
      %v931 = vld [vmem:[%s8 + $0x20] sm:$0xff]
      %v932 = vld [vmem:[%s8 + $0x28] sm:$0xff]
      %v933 = vld [vmem:[%s8 + $0x30] sm:$0xff]
      %935 = vset.pattern.permute.xlu0 0
      %936 = vperm.xlu0 %935, %v927
      %v937 = vpop.permute.xlu0 %936
      %940 = vset.pattern.permute.xlu0 0
      %941 = vperm.xlu0 %940, %v928
      %v942 = vpop.permute.xlu0 %941
      %945 = vset.pattern.permute.xlu0 0
      %946 = vperm.xlu0 %945, %v929
      %v947 = vpop.permute.xlu0 %946
      %950 = vset.pattern.permute.xlu0 0
      %951 = vperm.xlu0 %950, %v930
      %v952 = vpop.permute.xlu0 %951
      %955 = vset.pattern.permute.xlu0 0
      %956 = vperm.xlu0 %955, %v931
      %v957 = vpop.permute.xlu0 %956
      %960 = vset.pattern.permute.xlu0 0
      %961 = vperm.xlu0 %960, %v932
      %v962 = vpop.permute.xlu0 %961
      %965 = vset.pattern.permute.xlu0 0
      %966 = vperm.xlu0 %965, %v933
      %v967 = vpop.permute.xlu0 %966
      %v970 = vsel %vm614, %v920, 0
      %v973 = vsel %vm614, %v921, 0
      %v976 = vsel %vm614, %v922, 0
      %v979 = vsel %vm614, %v923, 0
      %v982 = vsel %vm614, %v924, 0
      %v985 = vsel %vm614, %v925, 0
      %v988 = vsel %vm614, %v926, 0
      %990 = vmatprep.subr.mxu0 0.0
      %991 = vmatpush1.msra.mxu0 %v913
      %992 = vmatprep.subr.mxu0 0.0
      %993 = vmatpush1.msra.mxu0 %v914
      %994 = vmatprep.subr.mxu0 0.0
      %995 = vmatpush1.msra.mxu0 %v915
      %996 = vmatprep.subr.mxu0 0.0
      %997 = vmatpush1.msra.mxu0 %v916
      %998 = vmatprep.subr.mxu0 0.0
      %999 = vmatpush1.msra.mxu0 %v917
      %1000 = vmatprep.subr.mxu0 0.0
      %1001 = vmatpush1.msra.mxu0 %v918
      %1002 = vmatprep.subr.mxu0 0.0
      %1003 = vmatpush1.msra.mxu0 %v919
      %1004 = vmatprep.subr.mxu0 0.0
      %1005 = vmatpush1.msra.mxu0 0.0
      %1006 = vmatprep.subr.mxu0 0.0
      %1007 = vmatpush1.msra.mxu0 0.0
      %1008 = vmatprep.subr.mxu0 0.0
      %1009 = vmatpush1.msra.mxu0 0.0
      %1010 = vmatprep.subr.mxu0 0.0
      %1011 = vmatpush1.msra.mxu0 0.0
      %1012 = vmatprep.subr.mxu0 0.0
      %1013 = vmatpush1.msra.mxu0 0.0
      %1014 = vmatprep.subr.mxu0 0.0
      %1015 = vmatpush1.msra.mxu0 0.0
      %1016 = vmatprep.subr.mxu0 0.0
      %1017 = vmatpush1.msra.mxu0 0.0
      %1018 = vmatprep.subr.mxu0 0.0
      %1019 = vmatpush1.msra.mxu0 0.0
      %1020 = vmatprep.subr.mxu0 0.0
      %1021 = vmatpush1.msra.mxu0 0.0
      %1022 = vmatprep.subr.mxu0 0.0
      %1023 = vmatpush1.msra.mxu0 0.0
      %1024 = vmatprep.subr.mxu0 0.0
      %1025 = vmatpush1.msra.mxu0 0.0
      %1026 = vmatprep.subr.mxu0 0.0
      %1027 = vmatpush1.msra.mxu0 0.0
      %1028 = vmatprep.subr.mxu0 0.0
      %1029 = vmatpush1.msra.mxu0 0.0
      %1030 = vmatprep.subr.mxu0 0.0
      %1031 = vmatpush1.msra.mxu0 0.0
      %1032 = vmatprep.subr.mxu0 0.0
      %1033 = vmatpush1.msra.mxu0 0.0
      %1034 = vmatprep.subr.mxu0 0.0
      %1035 = vmatpush1.msra.mxu0 0.0
      %1036 = vmatprep.subr.mxu0 0.0
      %1037 = vmatpush1.msra.mxu0 0.0
      %1038 = vmatprep.subr.mxu0 0.0
      %1039 = vmatpush1.msra.mxu0 0.0
      %1040 = vmatprep.subr.mxu0 0.0
      %1041 = vmatpush1.msra.mxu0 0.0
      %1042 = vmatprep.subr.mxu0 0.0
      %1043 = vmatpush1.msra.mxu0 0.0
      %1044 = vmatprep.subr.mxu0 0.0
      %1045 = vmatpush1.msra.mxu0 0.0
      %1046 = vmatprep.subr.mxu0 0.0
      %1047 = vmatpush1.msra.mxu0 0.0
      %1048 = vmatprep.subr.mxu0 0.0
      %1049 = vmatpush1.msra.mxu0 0.0
      %1050 = vmatprep.subr.mxu0 0.0
      %1051 = vmatpush1.msra.mxu0 0.0
      %1052 = vmatprep.subr.mxu0 0.0
      %1053 = vmatpush1.msra.mxu0 0.0
      %1054 = vmatprep.mubr.f32.mxu0 0.0
      %1055 = vmatmul.mubr.f32.gmra.mrb[0].mxu0 %v970
      %v1056 = vpop.f32.mrb[0].mxu0
      %v1057 = vadd.f32 %v937, %v1056
      %v1058 = vpop.f32.mrb[0].mxu0
      %1059 = vmatprep.mubr.f32.mxu0 0.0
      %1060 = vmatmul.mubr.f32.gmra.mrb[0].mxu0 %v973
      %v1061 = vpop.f32.mrb[0].mxu0
      %v1062 = vadd.f32 %v942, %v1061
      %v1063 = vpop.f32.mrb[0].mxu0
      %1064 = vmatprep.mubr.f32.mxu0 0.0
      %1065 = vmatmul.mubr.f32.gmra.mrb[0].mxu0 %v976
      %v1066 = vpop.f32.mrb[0].mxu0
      %v1067 = vadd.f32 %v947, %v1066
      %v1068 = vpop.f32.mrb[0].mxu0
      %1069 = vmatprep.mubr.f32.mxu0 0.0
      %1070 = vmatmul.mubr.f32.gmra.mrb[0].mxu0 %v979
      %v1071 = vpop.f32.mrb[0].mxu0
      %v1072 = vadd.f32 %v952, %v1071
      %v1073 = vpop.f32.mrb[0].mxu0
      %1074 = vmatprep.mubr.f32.mxu0 0.0
      %1075 = vmatmul.mubr.f32.gmra.mrb[0].mxu0 %v982
      %v1076 = vpop.f32.mrb[0].mxu0
      %v1077 = vadd.f32 %v957, %v1076
      %v1078 = vpop.f32.mrb[0].mxu0
      %1079 = vmatprep.mubr.f32.mxu0 0.0
      %1080 = vmatmul.mubr.f32.gmra.mrb[0].mxu0 %v985
      %v1081 = vpop.f32.mrb[0].mxu0
      %v1082 = vadd.f32 %v962, %v1081
      %v1083 = vpop.f32.mrb[0].mxu0
      %1084 = vmatprep.mubr.f32.mxu0 0.0
      %1085 = vmatmul.mubr.f32.gmra.mrb[0].mxu0 %v988
      %v1086 = vpop.f32.mrb[0].mxu0
      %v1087 = vadd.f32 %v967, %v1086
      %v1088 = vpop.f32.mrb[0].mxu0
      %1089 = vdwg.mxu0
      %v1090 = vtanh.pop %v1057
      %v1091 = vtanh.pop %v1062
      %v1092 = vtanh.pop %v1067
      %v1093 = vtanh.pop %v1072
      %v1094 = vtanh.pop %v1077
      %v1095 = vtanh.pop %v1082
      %v1096 = vtanh.pop %v1087
      %v1097 = vld [vmem:[%s9] sm:$0x1]
      %v1098 = vld [vmem:[#allocation2] sm:$0x1]
      %1100 = vset.pattern.permute.xlu0 0
      %1101 = vperm.xlu0 %1100, %v1098
      %v1102 = vpop.permute.xlu0 %1101
      %v1104 = vlaneseq
      %v1105 = vshrl.u32 %v1104, 7
      %v1106 = vsub.s32 0, %v1105
      %v1107 = vrot.slane %v1102, %v1106
      %v1109 = vsel %vm614, %v1097, 0
      %1111 = vmatprep.subr.mxu0 0.0
      %1112 = vmatpush1.msra.mxu0 %v1090
      %1113 = vmatprep.subr.mxu0 0.0
      %1114 = vmatpush1.msra.mxu0 %v1091
      %1115 = vmatprep.subr.mxu0 0.0
      %1116 = vmatpush1.msra.mxu0 %v1092
      %1117 = vmatprep.subr.mxu0 0.0
      %1118 = vmatpush1.msra.mxu0 %v1093
      %1119 = vmatprep.subr.mxu0 0.0
      %1120 = vmatpush1.msra.mxu0 %v1094
      %1121 = vmatprep.subr.mxu0 0.0
      %1122 = vmatpush1.msra.mxu0 %v1095
      %1123 = vmatprep.subr.mxu0 0.0
      %1124 = vmatpush1.msra.mxu0 %v1096
      %1125 = vmatprep.subr.mxu0 0.0
      %1126 = vmatpush1.msra.mxu0 0.0
      %1127 = vmatprep.subr.mxu0 0.0
      %1128 = vmatpush1.msra.mxu0 0.0
      %1129 = vmatprep.subr.mxu0 0.0
      %1130 = vmatpush1.msra.mxu0 0.0
      %1131 = vmatprep.subr.mxu0 0.0
      %1132 = vmatpush1.msra.mxu0 0.0
      %1133 = vmatprep.subr.mxu0 0.0
      %1134 = vmatpush1.msra.mxu0 0.0
      %1135 = vmatprep.subr.mxu0 0.0
      %1136 = vmatpush1.msra.mxu0 0.0
      %1137 = vmatprep.subr.mxu0 0.0
      %1138 = vmatpush1.msra.mxu0 0.0
      %1139 = vmatprep.subr.mxu0 0.0
      %1140 = vmatpush1.msra.mxu0 0.0
      %1141 = vmatprep.subr.mxu0 0.0
      %1142 = vmatpush1.msra.mxu0 0.0
      %1143 = vmatprep.subr.mxu0 0.0
      %1144 = vmatpush1.msra.mxu0 0.0
      %1145 = vmatprep.subr.mxu0 0.0
      %1146 = vmatpush1.msra.mxu0 0.0
      %1147 = vmatprep.subr.mxu0 0.0
      %1148 = vmatpush1.msra.mxu0 0.0
      %1149 = vmatprep.subr.mxu0 0.0
      %1150 = vmatpush1.msra.mxu0 0.0
      %1151 = vmatprep.subr.mxu0 0.0
      %1152 = vmatpush1.msra.mxu0 0.0
      %1153 = vmatprep.subr.mxu0 0.0
      %1154 = vmatpush1.msra.mxu0 0.0
      %1155 = vmatprep.subr.mxu0 0.0
      %1156 = vmatpush1.msra.mxu0 0.0
      %1157 = vmatprep.subr.mxu0 0.0
      %1158 = vmatpush1.msra.mxu0 0.0
      %1159 = vmatprep.subr.mxu0 0.0
      %1160 = vmatpush1.msra.mxu0 0.0
      %1161 = vmatprep.subr.mxu0 0.0
      %1162 = vmatpush1.msra.mxu0 0.0
      %1163 = vmatprep.subr.mxu0 0.0
      %1164 = vmatpush1.msra.mxu0 0.0
      %1165 = vmatprep.subr.mxu0 0.0
      %1166 = vmatpush1.msra.mxu0 0.0
      %1167 = vmatprep.subr.mxu0 0.0
      %1168 = vmatpush1.msra.mxu0 0.0
      %1169 = vmatprep.subr.mxu0 0.0
      %1170 = vmatpush1.msra.mxu0 0.0
      %1171 = vmatprep.subr.mxu0 0.0
      %1172 = vmatpush1.msra.mxu0 0.0
      %1173 = vmatprep.subr.mxu0 0.0
      %1174 = vmatpush1.msra.mxu0 0.0
      %1175 = vmatprep.mubr.f32.mxu0 0.0
      %1176 = vmatmul.mubr.f32.gmra.mrb[0].mxu0 %v1109
      %v1177 = vpop.f32.mrb[0].mxu0
      %v1178 = vadd.f32 %v1107, %v1177
      %v1179 = vpop.f32.mrb[0].mxu0
      %1180 = vdwg.mxu0
      %1181 = vst [vmem:[%s381] sm:$0x1] %v1178
      %p1182 = scmp.lt.s32.totalorder %s24, 1
      %s1183 = scalar_select %p1182, %s24, 1
      %s1184 = scalar_lea.vmem %s11, %s1183
      // Predicated region
      $region65: #{pinn_forward.1} parent=63 // pred_check
        %p1185 = pneg %p278
      $region66: #{pinn_forward.1} parent=63 // pred_check_branch
        %1187 = sbr.rel (%p1185) target = $region68
      $region67: #{pinn_forward.1} parent=63 // pred_region
        _
      $region68: #{pinn_forward.1} parent=63 // pred_fallthru
        _
    $region64: #{pinn_forward.1} parent=5 // pred_fallthru
      _
    %p1188 = scmp.le.s32.totalorder 2, %s19
    // Predicated region
    $region69: #{pinn_forward.1} parent=5 // pred_check
      %p1189 = pneg %p1188
    $region70: #{pinn_forward.1} parent=5 // pred_check_branch
      %1191 = sbr.rel (%p1189) target = $region72
    $region71: #{pinn_forward.1} parent=5 // pred_region
      %s1192 = ssub.s32 %s19, 2
      // Predicated region
      $region73: #{pinn_forward.1} parent=71 // pred_check
        %p1193 = pneg %p284
      $region74: #{pinn_forward.1} parent=71 // pred_check_branch
        %1195 = sbr.rel (%p1193) target = $region76
      $region75: #{pinn_forward.1} parent=71 // pred_region
        %p1196 = scmp.lt.s32.totalorder %s25, 1
        %s1197 = scalar_select %p1196, %s25, 1
        %s1198 = scalar_lea.vmem %s11, %s1197
      $region76: #{pinn_forward.1} parent=71 // pred_fallthru
        _
    $region72: #{pinn_forward.1} parent=5 // pred_fallthru
      _
  $region6: #{pinn_forward.1} parent=0 // loop_footer
    %s23 = sadd.s32 1, %s19
  $region7: #{pinn_forward.1} parent=0 // loop_footer_branch
    %18 = sbr.rel target = $region3
  $region8: #{pinn_forward.1} parent=0 // loop_exit
    _

</llo_original>
